<compile_context>
chip_gen: v7x
topology: tpu7x:2x2x1
jax: 0.10.0
libtpu: 0.0.40
codegen_flags: <defaults>
</compile_context>

<pallas_src>
import functools
import math

import jax
import jax.numpy as jnp
from jax.experimental import pallas as pl
from jax.experimental.pallas import tpu as pltpu


# ----------------------------- Pallas kernel -------------------------------

def _masked_conv_matmul_kernel(x_ref, w_ref, b_ref, o_ref, acc_ref):
    """One (super-group, M-tile, K-tile) grid step of the implicit GEMM.

    x_ref:   (TM, TK)      im2col patch tile
    w_ref:   (TK, COUT_P)  pre-masked, pre-transposed (block-diagonal) weights
    b_ref:   (1,  COUT_P)  f32 bias
    o_ref:   (TM, COUT_P)  output tile (f32 or bf16)
    acc_ref: (TM, COUT_P)  f32 accumulator scratch, resident across the K axis
    """
    k = pl.program_id(2)

    @pl.when(k == 0)
    def _():
        acc_ref[...] = jnp.zeros_like(acc_ref)

    acc_ref[...] += jnp.dot(x_ref[...], w_ref[...],
                            preferred_element_type=jnp.float32)   # MXU, f32 acc

    @pl.when(k == pl.num_programs(2) - 1)
    def _():
        o_ref[...] = (acc_ref[...] + b_ref[...]).astype(o_ref.dtype)


# ------------------------------ host helpers -------------------------------

def _round_up(x, m):
    return (x + m - 1) // m * m


def _pad_axis(a, axis, new_size):
    pad = new_size - a.shape[axis]
    if pad == 0:
        return a
    widths = [(0, 0)] * a.ndim
    widths[axis] = (0, pad)
    return jnp.pad(a, widths)


def _im2col(x, kh, kw, stride, padding):
    """x: (N, C, H, W) -> patches (N*Ho*Wo, C*kh*kw), columns ordered (c, kh, kw).

    This matches PyTorch's OIHW weight flattening and keeps per-group columns
    contiguous (group-major).  Runs under jit, so the slices/stack/transpose fuse.
    """
    N, C, H, W = x.shape
    xp = jnp.pad(x, ((0, 0), (0, 0), (padding, padding), (padding, padding)))
    Ho = (H + 2 * padding - kh) // stride + 1
    Wo = (W + 2 * padding - kw) // stride + 1
    cols = []
    for i in range(kh):
        for j in range(kw):
            patch = xp[:, :, i:i + stride * Ho:stride, j:j + stride * Wo:stride]
            cols.append(patch)                            # (N, C, Ho, Wo)
    cols = jnp.stack(cols, axis=2)                        # (N, C, kh*kw, Ho, Wo)
    cols = cols.transpose(0, 3, 4, 1, 2)                  # (N, Ho, Wo, C, kh*kw)
    return cols.reshape(N * Ho * Wo, C * kh * kw), Ho, Wo


def _vmem_budget():
    """(tile budget, vmem_limit cap) chosen per TPU generation."""
    try:
        cap = pltpu.get_tpu_info().vmem_capacity_bytes
    except Exception:
        cap = 64 * 2 ** 20                       # be conservative (v7x-like)
    if cap >= 96 * 2 ** 20:                      # v5e / v6e: 128 MiB physical
        return 64 * 2 ** 20, 96 * 2 ** 20
    return 24 * 2 ** 20, 40 * 2 ** 20            # v7x: 64 MiB physical


def _tile_bytes(tm, tk, cout_p, in_dsize, out_dsize):
    # double-buffered patch / weight / bias / output tiles + f32 accumulator
    return (2 * tm * tk * in_dsize
            + 2 * tk * cout_p * in_dsize
            + 2 * cout_p * 4
            + 2 * tm * cout_p * out_dsize
            + tm * cout_p * 4)


def _choose_tiles(M, K_pad, cout_p, n_super_groups, in_dsize, out_dsize, budget):
    # K tile: whole K when it fits, else the largest multiple of 128 dividing K_pad
    # (256-aligned options first for the 2x256^2 MXUs on v6e/v7x).
    tk = K_pad
    if tk > 1024:
        for cand in (1024, 512, 256, 128):
            if K_pad % cand == 0:
                tk = cand
                break
    # M tile: largest power of two fitting the VMEM budget (multiples of 128
    # preferred; measured pipelining efficiency peaks at 512-1024 row tiles).
    tm = 1024
    while tm > 8 and _tile_bytes(tm, tk, cout_p, in_dsize, out_dsize) > budget:
        tm //= 2
    tm = max(8, tm)
    # Don't tile far past the (padded) problem size.
    tm = min(tm, max(128, _round_up(M, 128)))
    # Megacore (v7x has 2 TensorCores): keep >= 2 independent "parallel" grid
    # units when there is only a single (super-)group to shard over.
    if n_super_groups == 1 and M > 128:
        tm = min(tm, max(128, _round_up((M + 1) // 2, 128)))
    return tm, tk


def _group_pack_factor(groups, cout_g, K, dsize):
    """How many groups to pack into one 128-lane output tile (block-diag weight)."""
    if groups == 1 or cout_g >= 128:
        return 1
    max_pack = max(1, 128 // cout_g)
    # Cap the block-diagonal weight blow-up (weight HBM stream grows gp x).
    while max_pack > 1 and groups * K * cout_g * max_pack * dsize > 16 * 2 ** 20:
        max_pack //= 2
    gp = 1
    for d in range(1, groups + 1):
        if groups % d == 0 and d <= max_pack:
            gp = d
    return gp


# ------------------------------- wrapper ------------------------------------

@functools.partial(jax.jit, static_argnames=("stride", "padding", "groups",
                                              "compute_dtype", "out_dtype"))
def masked_conv2d(x, weight, mask, bias=None, *, stride=1, padding=0, groups=1,
                  compute_dtype=jnp.float32, out_dtype=None):
    """Equivalent of F.conv2d(x, weight * mask, bias, stride, padding, groups).

    x:      (N, Cin, H, W)          float32, NCHW
    weight: (Cout, Cin//g, kh, kw)  float32
    mask:   same shape as weight (0/1 prune mask)
    bias:   (Cout,) or None
    compute_dtype: jnp.float32 or jnp.bfloat16 (MXU operands; accumulation is f32)
    out_dtype: kernel output dtype; defaults to compute_dtype (bf16 halves the
               dominant writeback stream on the fast path).
    """
    N, Cin, H, W = x.shape
    Cout, Cin_g, kh, kw = weight.shape
    assert Cin == Cin_g * groups and Cout % groups == 0
    Cout_g = Cout // groups
    K = Cin_g * kh * kw
    if out_dtype is None:
        out_dtype = compute_dtype
    in_dsize = jnp.dtype(compute_dtype).itemsize
    out_dsize = jnp.dtype(out_dtype).itemsize

    # Fold the prune mask into the weights once, on the host side (f32, exact).
    w_eff = weight * mask

    # Pack small groups into one lane tile (block-diagonal weight).
    gp = _group_pack_factor(groups, Cout_g, K, in_dsize)
    G = groups // gp                # super-groups -> grid axis 0
    K_sg = gp * K                   # contraction length per super-group
    Cout_sg = gp * Cout_g           # real output channels per super-group

    # im2col once; per-(super-)group K columns are contiguous (group-major).
    patches, Ho, Wo = _im2col(x, kh, kw, stride, padding)    # (M, Cin*kh*kw)
    M = N * Ho * Wo
    patches = patches.reshape(M, G, K_sg).transpose(1, 0, 2)  # (G, M, K_sg)

    # Padded tile geometry (lane-dense K and Cout).
    cout_p = _round_up(max(Cout_sg, 128), 128)
    K_pad = _round_up(max(K_sg, 128), 128)
    budget, vmem_cap = _vmem_budget()
    TM, TK = _choose_tiles(M, K_pad, cout_p, G, in_dsize, out_dsize, budget)
    M_pad = _round_up(M, TM)

    patches = _pad_axis(_pad_axis(patches, 1, M_pad), 2, K_pad)
    patches = patches.astype(compute_dtype)

    # Weights: (G, K_pad, cout_p) pre-masked, pre-transposed, block-diagonal.
    w_g = w_eff.reshape(groups, Cout_g, K).transpose(0, 2, 1)  # (groups, K, Cout_g)
    if gp > 1:
        w_g = w_g.reshape(G, gp, K, Cout_g)
        eye = jnp.eye(gp, dtype=w_g.dtype)
        w_g = jnp.einsum("gpkc,pq->gpkqc", w_g, eye).reshape(G, K_sg, Cout_sg)
    else:
        w_g = w_g.reshape(G, K_sg, Cout_sg)
    w_g = _pad_axis(_pad_axis(w_g, 1, K_pad), 2, cout_p).astype(compute_dtype)

    if bias is None:
        b_g = jnp.zeros((G, 1, cout_p), jnp.float32)
    else:
        b_g = _pad_axis(bias.astype(jnp.float32).reshape(G, 1, Cout_sg), 2, cout_p)

    grid = (G, M_pad // TM, K_pad // TK)

    tile_bytes = _tile_bytes(TM, TK, cout_p, in_dsize, out_dsize)
    vmem_limit = int(min(max(tile_bytes + 2 * 2 ** 20, 4 * 2 ** 20), vmem_cap))
    flops = 2 * G * M_pad * K_pad * cout_p
    bytes_accessed = int(patches.size * in_dsize + w_g.size * in_dsize
                         + b_g.size * 4 + G * M_pad * cout_p * out_dsize)

    out = pl.pallas_call(
        _masked_conv_matmul_kernel,
        out_shape=jax.ShapeDtypeStruct((G, M_pad, cout_p), out_dtype),
        grid_spec=pltpu.PrefetchScalarGridSpec(
            num_scalar_prefetch=0,
            grid=grid,
            in_specs=[
                pl.BlockSpec((None, TM, TK), lambda g, i, k: (g, i, k)),       # X
                pl.BlockSpec((None, TK, cout_p), lambda g, i, k: (g, k, 0)),   # W
                pl.BlockSpec((None, 1, cout_p), lambda g, i, k: (g, 0, 0)),    # b
            ],
            out_specs=pl.BlockSpec((None, TM, cout_p), lambda g, i, k: (g, i, 0)),
            scratch_shapes=[pltpu.VMEM((TM, cout_p), jnp.float32)],
        ),
        compiler_params=pltpu.CompilerParams(
            dimension_semantics=("parallel", "parallel", "arbitrary"),
            vmem_limit_bytes=vmem_limit),
        cost_estimate=pl.CostEstimate(flops=flops, transcendentals=0,
                                      bytes_accessed=bytes_accessed),
    )(patches, w_g, b_g)

    out = out[:, :M, :Cout_sg]                              # drop M / lane padding
    out = out.transpose(1, 0, 2).reshape(N, Ho, Wo, Cout)   # groups -> channels
    return out.transpose(0, 3, 1, 2)                        # NHWC -> NCHW


# --------------------------------- demo --------------------------------------

if __name__ == "__main__":
    key = jax.random.PRNGKey(0)

    def make_params(k, Cout, Cin_g, ks):
        kw_, kb_ = jax.random.split(k)
        stdv = 1.0 / math.sqrt(Cin_g)
        weight = jax.random.uniform(kw_, (Cout, Cin_g, ks, ks), jnp.float32,
                                    minval=-stdv, maxval=stdv)
        bias = jax.random.uniform(kb_, (Cout,), jnp.float32,
                                  minval=-stdv, maxval=stdv)
        # Deterministic prune-style mask (like MaskedConv2d.prune(threshold)).
        mask = jnp.where(jnp.abs(weight) < 0.1, 0.0, 1.0).astype(jnp.float32)
        return weight, bias, mask

    def reference(x, w, m, b, stride, padding, groups):
        out = jax.lax.conv_general_dilated(
            x, w * m, window_strides=(stride, stride),
            padding=[(padding, padding), (padding, padding)],
            dimension_numbers=("NCHW", "OIHW", "NCHW"),
            feature_group_count=groups)
        return out + b.reshape(1, -1, 1, 1)

    N, Cin, H, W = 2, 4, 16, 16
    x = jax.random.normal(jax.random.PRNGKey(1), (N, Cin, H, W), jnp.float32)

    # Case 1: groups=1, stride=1, padding=1, f32 operands (tight accuracy).
    Cout, ks = 8, 3
    w, b, m = make_params(key, Cout, Cin, ks)
    out = masked_conv2d(x, w, m, b, stride=1, padding=1, groups=1,
                        compute_dtype=jnp.float32)
    out = jax.block_until_ready(out)
    ref = reference(x, w, m, b, 1, 1, 1)
    assert out.shape == ref.shape == (N, Cout, H, W)
    assert jnp.allclose(out, ref, atol=1e-3, rtol=1e-3), \
        f"f32 mismatch: {jnp.max(jnp.abs(out - ref))}"

    # Case 2: grouped conv (groups=2, packed block-diagonal), stride=2, no pad.
    groups2, stride2, padding2 = 2, 2, 0
    w2, b2, m2 = make_params(jax.random.PRNGKey(2), Cout, Cin // groups2, ks)
    out2 = masked_conv2d(x, w2, m2, b2, stride=stride2, padding=padding2,
                         groups=groups2, compute_dtype=jnp.float32)
    out2 = jax.block_until_ready(out2)
    ref2 = reference(x, w2, m2, b2, stride2, padding2, groups2)
    assert out2.shape == ref2.shape
    assert jnp.allclose(out2, ref2, atol=1e-3, rtol=1e-3), \
        f"grouped f32 mismatch: {jnp.max(jnp.abs(out2 - ref2))}"

    # Case 3: bf16 MXU operands + bf16 output, f32 accumulation (fast path).
    out3 = masked_conv2d(x, w, m, b, stride=1, padding=1, groups=1,
                         compute_dtype=jnp.bfloat16)
    out3 = jax.block_until_ready(out3)
    assert jnp.allclose(out3.astype(jnp.float32), ref, atol=1e-1, rtol=1e-1), \
        f"bf16 mismatch: {jnp.max(jnp.abs(out3.astype(jnp.float32) - ref))}"

    print("KERNEL_OK")
</pallas_src>

<mosaic_0001>
module attributes {stable_mosaic.version = 11 : i64} {
  func.func @_masked_conv_matmul_kernel(%arg0: i32, %arg1: i32, %arg2: i32, %arg3: memref<1x256x128xf32, #tpu.memory_space<vmem>>, %arg4: memref<1x128x128xf32, #tpu.memory_space<vmem>>, %arg5: memref<1x1x128xf32, #tpu.memory_space<vmem>>, %arg6: memref<1x256x128xf32, #tpu.memory_space<vmem>>, %arg7: memref<256x128xf32, #tpu.memory_space<vmem>>) attributes {dimension_semantics = [#tpu.dimension_semantics<parallel>, #tpu.dimension_semantics<parallel>, #tpu.dimension_semantics<arbitrary>], iteration_bounds = array<i64: 1, 2, 1>, scalar_prefetch = 0 : i64, scratch_operands = 1 : i64, tpu.core_type = #tpu.core_type<tc>, window_params = [{transform_indices = @transform_0, window_bounds = array<i64: 1, 256, 128>}, {transform_indices = @transform_1, window_bounds = array<i64: 1, 128, 128>}, {transform_indices = @transform_2, window_bounds = array<i64: 1, 1, 128>}, {transform_indices = @transform_3, window_bounds = array<i64: 1, 256, 128>}]} {
    %c0_i32 = arith.constant 0 : i32
    %0 = arith.cmpi eq, %arg2, %c0_i32 : i32
    %1 = arith.extui %0 : i1 to i32
    %c0_i32_0 = arith.constant 0 : i32
    %2 = arith.cmpi ne, %1, %c0_i32_0 : i32
    scf.if %2 {
      %cst_12 = arith.constant 0.000000e+00 : f32
      %14 = vector.broadcast %cst_12 : f32 to vector<256x128xf32>
      %c0_13 = arith.constant 0 : index
      %c0_14 = arith.constant 0 : index
      %15 = vector.load %arg7[%c0_13, %c0_14] : memref<256x128xf32, #tpu.memory_space<vmem>>, vector<256x128xf32>
      tpu.vector_store %arg7[%c0_13, %c0_14], %14 {strides = array<i32>} : memref<256x128xf32, #tpu.memory_space<vmem>>, vector<256x128xf32>,
    } else {
    }
    %c0 = arith.constant 0 : index
    %c0_1 = arith.constant 0 : index
    %3 = vector.load %arg7[%c0, %c0_1] : memref<256x128xf32, #tpu.memory_space<vmem>>, vector<256x128xf32>
    %c0_2 = arith.constant 0 : index
    %c0_3 = arith.constant 0 : index
    %c0_4 = arith.constant 0 : index
    %4 = vector.load %arg3[%c0_2, %c0_3, %c0_4] : memref<1x256x128xf32, #tpu.memory_space<vmem>>, vector<1x256x128xf32>
    %5 = vector.shape_cast %4 : vector<1x256x128xf32> to vector<256x128xf32>
    %c0_5 = arith.constant 0 : index
    %c0_6 = arith.constant 0 : index
    %c0_7 = arith.constant 0 : index
    %6 = vector.load %arg4[%c0_5, %c0_6, %c0_7] : memref<1x128x128xf32, #tpu.memory_space<vmem>>, vector<1x128x128xf32>
    %7 = vector.shape_cast %6 : vector<1x128x128xf32> to vector<128x128xf32>
    %cst = arith.constant dense<0.000000e+00> : vector<256x128xf32>
    %8 = tpu.matmul %5, %7, %cst {dimension_numbers = #tpu.dot_dimension_numbers<[1], [0], [0], [1], [0, 0, 1, 1], [], []>} : vector<256x128xf32>, vector<128x128xf32>, vector<256x128xf32> -> vector<256x128xf32>
    %9 = arith.addf %3, %8 : vector<256x128xf32>
    %c0_8 = arith.constant 0 : index
    %c0_9 = arith.constant 0 : index
    %10 = vector.load %arg7[%c0_8, %c0_9] : memref<256x128xf32, #tpu.memory_space<vmem>>, vector<256x128xf32>
    tpu.vector_store %arg7[%c0_8, %c0_9], %9 {strides = array<i32>} : memref<256x128xf32, #tpu.memory_space<vmem>>, vector<256x128xf32>,
    %c0_i32_10 = arith.constant 0 : i32
    %11 = arith.cmpi eq, %arg2, %c0_i32_10 : i32
    %12 = arith.extui %11 : i1 to i32
    %c0_i32_11 = arith.constant 0 : i32
    %13 = arith.cmpi ne, %12, %c0_i32_11 : i32
    scf.if %13 {
      %c0_12 = arith.constant 0 : index
      %c0_13 = arith.constant 0 : index
      %14 = vector.load %arg7[%c0_12, %c0_13] : memref<256x128xf32, #tpu.memory_space<vmem>>, vector<256x128xf32>
      %c0_14 = arith.constant 0 : index
      %c0_15 = arith.constant 0 : index
      %c0_16 = arith.constant 0 : index
      %15 = vector.load %arg5[%c0_14, %c0_15, %c0_16] : memref<1x1x128xf32, #tpu.memory_space<vmem>>, vector<1x1x128xf32>
      %16 = vector.shape_cast %15 : vector<1x1x128xf32> to vector<1x128xf32>
      %17 = vector.broadcast %16 : vector<1x128xf32> to vector<256x128xf32>
      %18 = arith.addf %14, %17 : vector<256x128xf32>
      %c0_17 = arith.constant 0 : index
      %c0_18 = arith.constant 0 : index
      %c0_19 = arith.constant 0 : index
      %19 = vector.load %arg6[%c0_17, %c0_18, %c0_19] : memref<1x256x128xf32, #tpu.memory_space<vmem>>, vector<1x256x128xf32>
      %20 = vector.shape_cast %19 : vector<1x256x128xf32> to vector<256x128xf32>
      %21 = vector.shape_cast %18 : vector<256x128xf32> to vector<1x256x128xf32>
      tpu.vector_store %arg6[%c0_17, %c0_18, %c0_19], %21 {strides = array<i32>} : memref<1x256x128xf32, #tpu.memory_space<vmem>>, vector<1x256x128xf32>,
    } else {
    }
    return
  }
  func.func @transform_0(%arg0: i32, %arg1: i32, %arg2: i32) -> (i32, i32, i32) {
    %c0_i32 = arith.constant 0 : i32
    return %arg0, %arg1, %arg2 : i32, i32, i32
  }
  func.func @transform_1(%arg0: i32, %arg1: i32, %arg2: i32) -> (i32, i32, i32) {
    %c0_i32 = arith.constant 0 : i32
    %c0_i32_0 = arith.constant 0 : i32
    return %arg0, %arg2, %c0_i32 : i32, i32, i32
  }
  func.func @transform_2(%arg0: i32, %arg1: i32, %arg2: i32) -> (i32, i32, i32) {
    %c0_i32 = arith.constant 0 : i32
    %c0_i32_0 = arith.constant 0 : i32
    %c0_i32_1 = arith.constant 0 : i32
    return %arg0, %c0_i32, %c0_i32_0 : i32, i32, i32
  }
  func.func @transform_3(%arg0: i32, %arg1: i32, %arg2: i32) -> (i32, i32, i32) {
    %c0_i32 = arith.constant 0 : i32
    %c0_i32_0 = arith.constant 0 : i32
    return %arg0, %arg1, %c0_i32 : i32, i32, i32
  }
}

</mosaic_0001>

<llo_original>
// kernel: mul.1
$region0: #{mul.1}
  #allocation0 [shape = 's32[1]{0}', space=sflag, size = 0x4, scoped, tag = 'scoped memory for mul.1']
  %s0 = inlined_call_operand.vmem [shape: f32[8,4,3,3], index: 0, kind: input, shape index: {}]
  %s1 = inlined_call_operand.vmem [shape: f32[8,4,3,3], index: 1, kind: input, shape index: {}]
  %s2 = inlined_call_operand.vmem [shape: f32[8,4,3,3], index: 2, kind: output, shape index: {}]
  %v3 = vld [vmem:[%s0] sm:$0xf]
  %v4 = vld [vmem:[%s1] sm:$0xf]
  %5 = xla_tuple %v3, %v4
  %6 = xla_tuple %5
  %v7 = vmul.f32 %v3, %v4
  %8 = xla_tuple %v7
  %9 = vst [vmem:[%s2] sm:$0xf] %v7
  %s10 = scalar_lea.vmem %s0, 12
  %v11 = vld [vmem:[%s10] sm:$0xf]
  %s12 = scalar_lea.vmem %s1, 12
  %v13 = vld [vmem:[%s12] sm:$0xf]
  %14 = xla_tuple %v11, %v13
  %15 = xla_tuple %14
  %v16 = vmul.f32 %v11, %v13
  %17 = xla_tuple %v16
  %s18 = scalar_lea.vmem %s2, 12
  %19 = vst [vmem:[%s18] sm:$0xf] %v16
  %s20 = scalar_lea.vmem %s0, 24
  %v21 = vld [vmem:[%s20] sm:$0xf]
  %s22 = scalar_lea.vmem %s1, 24
  %v23 = vld [vmem:[%s22] sm:$0xf]
  %24 = xla_tuple %v21, %v23
  %25 = xla_tuple %24
  %v26 = vmul.f32 %v21, %v23
  %27 = xla_tuple %v26
  %s28 = scalar_lea.vmem %s2, 24
  %29 = vst [vmem:[%s28] sm:$0xf] %v26
  %s30 = scalar_lea.vmem %s0, 4
  %v31 = vld [vmem:[%s30] sm:$0xf]
  %s32 = scalar_lea.vmem %s1, 4
  %v33 = vld [vmem:[%s32] sm:$0xf]
  %34 = xla_tuple %v31, %v33
  %35 = xla_tuple %34
  %v36 = vmul.f32 %v31, %v33
  %37 = xla_tuple %v36
  %s38 = scalar_lea.vmem %s2, 4
  %39 = vst [vmem:[%s38] sm:$0xf] %v36
  %s40 = scalar_lea.vmem %s0, 16
  %v41 = vld [vmem:[%s40] sm:$0xf]
  %s42 = scalar_lea.vmem %s1, 16
  %v43 = vld [vmem:[%s42] sm:$0xf]
  %44 = xla_tuple %v41, %v43
  %45 = xla_tuple %44
  %v46 = vmul.f32 %v41, %v43
  %47 = xla_tuple %v46
  %s48 = scalar_lea.vmem %s2, 16
  %49 = vst [vmem:[%s48] sm:$0xf] %v46
  %s50 = scalar_lea.vmem %s0, 28
  %v51 = vld [vmem:[%s50] sm:$0xf]
  %s52 = scalar_lea.vmem %s1, 28
  %v53 = vld [vmem:[%s52] sm:$0xf]
  %54 = xla_tuple %v51, %v53
  %55 = xla_tuple %54
  %v56 = vmul.f32 %v51, %v53
  %57 = xla_tuple %v56
  %s58 = scalar_lea.vmem %s2, 28
  %59 = vst [vmem:[%s58] sm:$0xf] %v56
  %s60 = scalar_lea.vmem %s0, 8
  %v61 = vld [vmem:[%s60] sm:$0xf]
  %s62 = scalar_lea.vmem %s1, 8
  %v63 = vld [vmem:[%s62] sm:$0xf]
  %64 = xla_tuple %v61, %v63
  %65 = xla_tuple %64
  %v66 = vmul.f32 %v61, %v63
  %67 = xla_tuple %v66
  %s68 = scalar_lea.vmem %s2, 8
  %69 = vst [vmem:[%s68] sm:$0xf] %v66
  %s70 = scalar_lea.vmem %s0, 20
  %v71 = vld [vmem:[%s70] sm:$0xf]
  %s72 = scalar_lea.vmem %s1, 20
  %v73 = vld [vmem:[%s72] sm:$0xf]
  %74 = xla_tuple %v71, %v73
  %75 = xla_tuple %74
  %v76 = vmul.f32 %v71, %v73
  %77 = xla_tuple %v76
  %s78 = scalar_lea.vmem %s2, 20
  %79 = vst [vmem:[%s78] sm:$0xf] %v76
  %s80 = scalar_lea.vmem %s0, 32
  %v81 = vld [vmem:[%s80] sm:$0xf]
  %s82 = scalar_lea.vmem %s1, 32
  %v83 = vld [vmem:[%s82] sm:$0xf]
  %84 = xla_tuple %v81, %v83
  %85 = xla_tuple %84
  %v86 = vmul.f32 %v81, %v83
  %87 = xla_tuple %v86
  %s88 = scalar_lea.vmem %s2, 32
  %89 = vst [vmem:[%s88] sm:$0xf] %v86

// kernel: masked_conv2d.1
$region0: #{masked_conv2d.1}
  #allocation0 [shape = 'u32[]', space=smem, size = 0x4, offset = 0x4, fixed_abs, tag = 'smem constant byte address 0x4 - core index']
  #allocation1 [shape = 'u32[144,128]{1,0:T(1,128)}', space=vmem, size = 0x12000, scoped, tag = 'internal scratch']
  #allocation2 [shape = 'f32[256,128]{1,0:T(8,128)}', space=vmem, size = 0x20000, scoped, tag = 'scratch operand']
  %s0 = inlined_call_operand.vmem [shape: f32[1,512,128], index: 0, kind: input, shape index: {}]
  %s1 = inlined_call_operand.vmem [shape: f32[1,128,128], index: 1, kind: input, shape index: {}]
  %s2 = inlined_call_operand.vmem [shape: f32[1,1,128], index: 2, kind: input, shape index: {}]
  %s3 = inlined_call_operand.vmem [shape: f32[1,512,128], index: 3, kind: output, shape index: {}]
  %s4 = sld [smem:[#allocation0]]
  $region53: #{masked_conv2d.1} parent=0
    _
  %s6 = ssub.s32 1, %s4
  %s7 = scalar_select 0, %s6, %s4
  loop: start=0, step=1, limit=4
  $region2: #{masked_conv2d.1} parent=0 // loop_pre_header
    _
  $region3: #{masked_conv2d.1} parent=0 // loop_header
    %s9 = sphi 0, %s13
    %p10 = scmp.ge.s32.totalorder %s9, 4
    %s16 = sphi 0, %s35
    %s17 = sphi 0, %s31
    %s18 = sphi 0, %s27
    %s19 = sphi 0, %s16
    %s20 = sphi 0, %s17
    %s21 = sphi 0, %s18
    %s22 = sphi 0, %s19
    %s23 = sphi 0, %s20
    %s24 = sphi 0, %s21
    %s42 = sphi 0, %s44
    %s45 = sphi 0, %s42
    %s46 = sphi 0, %s45
    %s62 = sphi 0, %s46
    %s70 = sphi 0, %s72
    %s73 = sphi 0, %s70
    %s74 = sphi 0, %s73
    %s90 = sphi 0, %s74
    %s96 = sphi 0, %s98
    %s99 = sphi 0, %s96
    %s100 = sphi 0, %s99
    %s116 = sphi 0, %s100
    %s124 = sphi 0, %s126
    %s127 = sphi 0, %s124
    %s128 = sphi 0, %s127
    %s144 = sphi 0, %s128
  $region4: #{masked_conv2d.1} parent=0 // loop_header_branch
    %12 = sbr.rel (%p10) target = $region8
  $region5: #{masked_conv2d.1} parent=0 // loop_body
    %s14 = ssub.s32 %s9, 1
    %s15 = ssub.s32 %s9, 2
    %s25 = sadd.s32 1, %s18
    %p26 = scmp.ge.s32.totalorder %s25, 1
    %s27 = scalar_select %p26, 0, %s25
    %s28 = sadd.s32 1, %s17
    %s29 = scalar_select %p26, %s28, %s17
    %p30 = scmp.ge.s32.totalorder %s29, 2
    %s31 = scalar_select %p30, 0, %s29
    %s32 = sadd.s32 1, %s16
    %s33 = scalar_select %p30, %s32, %s16
    %p34 = scmp.ge.s32.totalorder %s33, 1
    %s35 = scalar_select %p34, 0, %s33
    %s36 = ssub.s32 %s16, %s35
    %s37 = ssub.s32 %s17, %s31
    %s38 = sor.u32 %s36, %s37
    %s39 = ssub.s32 %s18, %s27
    %s40 = sor.u32 %s38, %s39
    %p41 = scmp.eq.s32.totalorder %s40, 0
    %s43 = sadd.s32 %s42, 1
    %s44 = scalar_select %p41, %s42, %s43
    %p47 = pneg %p41
    %p48 = scmp.eq.s32.totalorder %s9, 1
    %p49 = por %p47, %p48
    %p50 = scmp.ne.s32.totalorder %s42, %s45
    %p51 = scmp.eq.s32.totalorder %s9, 0
    %p52 = por %p50, %p51
    %p53 = scmp.ne.s32.totalorder %s42, %s45
    %p54 = scmp.eq.s32.totalorder %s14, 1
    %p55 = por %p53, %p54
    %p56 = scmp.ne.s32.totalorder %s45, %s46
    %p57 = scmp.eq.s32.totalorder %s14, 0
    %p58 = por %p56, %p57
    %p59 = scmp.ne.s32.totalorder %s45, %s46
    %p60 = scmp.eq.s32.totalorder %s15, 1
    %p61 = por %p59, %p60
    %p63 = scmp.ne.s32.totalorder %s46, %s62
    %p64 = scmp.eq.s32.totalorder %s15, 0
    %p65 = por %p63, %p64
    %s66 = ssub.s32 %s16, %s35
    %s67 = ssub.s32 %s18, %s27
    %s68 = sor.u32 %s66, %s67
    %p69 = scmp.eq.s32.totalorder %s68, 0
    %s71 = sadd.s32 %s70, 1
    %s72 = scalar_select %p69, %s70, %s71
    %p75 = pneg %p69
    %p76 = scmp.eq.s32.totalorder %s9, 1
    %p77 = por %p75, %p76
    %p78 = scmp.ne.s32.totalorder %s70, %s73
    %p79 = scmp.eq.s32.totalorder %s9, 0
    %p80 = por %p78, %p79
    %p81 = scmp.ne.s32.totalorder %s70, %s73
    %p82 = scmp.eq.s32.totalorder %s14, 1
    %p83 = por %p81, %p82
    %p84 = scmp.ne.s32.totalorder %s73, %s74
    %p85 = scmp.eq.s32.totalorder %s14, 0
    %p86 = por %p84, %p85
    %p87 = scmp.ne.s32.totalorder %s73, %s74
    %p88 = scmp.eq.s32.totalorder %s15, 1
    %p89 = por %p87, %p88
    %p91 = scmp.ne.s32.totalorder %s74, %s90
    %p92 = scmp.eq.s32.totalorder %s15, 0
    %p93 = por %p91, %p92
    %s94 = ssub.s32 %s16, %s35
    %p95 = scmp.eq.s32.totalorder %s94, 0
    %s97 = sadd.s32 %s96, 1
    %s98 = scalar_select %p95, %s96, %s97
    %p101 = pneg %p95
    %p102 = scmp.eq.s32.totalorder %s9, 1
    %p103 = por %p101, %p102
    %p104 = scmp.ne.s32.totalorder %s96, %s99
    %p105 = scmp.eq.s32.totalorder %s9, 0
    %p106 = por %p104, %p105
    %p107 = scmp.ne.s32.totalorder %s96, %s99
    %p108 = scmp.eq.s32.totalorder %s14, 1
    %p109 = por %p107, %p108
    %p110 = scmp.ne.s32.totalorder %s99, %s100
    %p111 = scmp.eq.s32.totalorder %s14, 0
    %p112 = por %p110, %p111
    %p113 = scmp.ne.s32.totalorder %s99, %s100
    %p114 = scmp.eq.s32.totalorder %s15, 1
    %p115 = por %p113, %p114
    %p117 = scmp.ne.s32.totalorder %s100, %s116
    %p118 = scmp.eq.s32.totalorder %s15, 0
    %p119 = por %p117, %p118
    %s120 = ssub.s32 %s16, %s35
    %s121 = ssub.s32 %s17, %s31
    %s122 = sor.u32 %s120, %s121
    %p123 = scmp.eq.s32.totalorder %s122, 0
    %s125 = sadd.s32 %s124, 1
    %s126 = scalar_select %p123, %s124, %s125
    %p129 = pneg %p123
    %p130 = scmp.eq.s32.totalorder %s9, 1
    %p131 = por %p129, %p130
    %p132 = scmp.ne.s32.totalorder %s124, %s127
    %p133 = scmp.eq.s32.totalorder %s9, 0
    %p134 = por %p132, %p133
    %p135 = scmp.ne.s32.totalorder %s124, %s127
    %p136 = scmp.eq.s32.totalorder %s14, 1
    %p137 = por %p135, %p136
    %p138 = scmp.ne.s32.totalorder %s127, %s128
    %p139 = scmp.eq.s32.totalorder %s14, 0
    %p140 = por %p138, %p139
    %p141 = scmp.ne.s32.totalorder %s127, %s128
    %p142 = scmp.eq.s32.totalorder %s15, 1
    %p143 = por %p141, %p142
    %p145 = scmp.ne.s32.totalorder %s128, %s144
    %p146 = scmp.eq.s32.totalorder %s15, 0
    %p147 = por %p145, %p146
    %p148 = scmp.le.s32.totalorder 1, %s9
    %p149 = scmp.lt.s32.totalorder %s9, 3
    %p150 = pnand %p148, %p149
    %p151 = pneg %p150
    // Predicated region
    $region9: #{masked_conv2d.1} parent=5 // pred_check
      _
    $region10: #{masked_conv2d.1} parent=5 // pred_check_branch
      %153 = sbr.rel (%p150) target = $region12
    $region11: #{masked_conv2d.1} parent=5 // pred_region
      %s154 = ssub.s32 %s9, 1
      // Predicated region
      $region13: #{masked_conv2d.1} parent=11 // pred_check
        %p155 = pneg %p86
      $region14: #{masked_conv2d.1} parent=11 // pred_check_branch
        %157 = sbr.rel (%p155) target = $region16
      $region15: #{masked_conv2d.1} parent=11 // pred_region
        %s158 = smul.u32 16, %s21
        %p159 = scmp.lt.s32.totalorder %s19, 0
        %s160 = scalar_select %p159, %s19, 0
        %p161 = scmp.lt.s32.totalorder %s158, 15
        %s162 = scalar_select %p161, %s158, 15
        %s163 = smul.addr %s160, 16
        %s164 = sadd.s32 %s162, %s163
        %s165 = smul.addr %s164, 8
        %s166 = scalar_lea.vmem %s1, %s165
        %s167 = smul.u32 16, %s21
      $region16: #{masked_conv2d.1} parent=11 // pred_fallthru
        _
      // Predicated region
      $region17: #{masked_conv2d.1} parent=11 // pred_check
        %p168 = pneg %p112
      $region18: #{masked_conv2d.1} parent=11 // pred_check_branch
        %170 = sbr.rel (%p168) target = $region20
      $region19: #{masked_conv2d.1} parent=11 // pred_region
        %p171 = scmp.lt.s32.totalorder %s19, 0
        %s172 = scalar_select %p171, %s19, 0
        %s173 = scalar_lea.vmem %s2, %s172
      $region20: #{masked_conv2d.1} parent=11 // pred_fallthru
        _
    $region12: #{masked_conv2d.1} parent=5 // pred_fallthru
      _
    %p174 = scmp.lt.s32.totalorder %s9, 2
    // Predicated region
    $region21: #{masked_conv2d.1} parent=5 // pred_check
      %p175 = pneg %p174
    $region22: #{masked_conv2d.1} parent=5 // pred_check_branch
      %177 = sbr.rel (%p175) target = $region24
    $region23: #{masked_conv2d.1} parent=5 // pred_region
      // Predicated region
      $region25: #{masked_conv2d.1} parent=23 // pred_check
        %p178 = pneg %p52
      $region26: #{masked_conv2d.1} parent=23 // pred_check_branch
        %180 = sbr.rel (%p178) target = $region28
      $region27: #{masked_conv2d.1} parent=23 // pred_region
        %s181 = smul.u32 32, %s17
        %p182 = scmp.lt.s32.totalorder %s16, 0
        %s183 = scalar_select %p182, %s16, 0
        %p184 = scmp.lt.s32.totalorder %s181, 63
        %s185 = scalar_select %p184, %s181, 63
        %p186 = scmp.lt.s32.totalorder %s18, 0
        %s187 = scalar_select %p186, %s18, 0
        %s188 = sadd.s32 %s187, %s185
        %s189 = smul.addr %s183, 64
        %s190 = sadd.s32 %s188, %s189
        %s191 = smul.addr %s190, 8
        %s192 = scalar_lea.vmem %s0, %s191
        %s193 = smul.u32 32, %s17
      $region28: #{masked_conv2d.1} parent=23 // pred_fallthru
        _
    $region24: #{masked_conv2d.1} parent=5 // pred_fallthru
      _
    %p194 = scmp.le.s32.totalorder 1, %s9
    %p195 = scmp.lt.s32.totalorder %s9, 3
    %p196 = pnand %p194, %p195
    %p197 = pneg %p196
    // Predicated region
    $region29: #{masked_conv2d.1} parent=5 // pred_check
      _
    $region30: #{masked_conv2d.1} parent=5 // pred_check_branch
      %199 = sbr.rel (%p196) target = $region32
    $region31: #{masked_conv2d.1} parent=5 // pred_region
      %s200 = ssub.s32 %s9, 1
      %s201 = smul.u32 32, %s20
      %p202 = scmp.lt.s32.totalorder %s19, 0
      %s203 = scalar_select %p202, %s19, 0
      %p204 = scmp.lt.s32.totalorder %s201, 63
      %s205 = scalar_select %p204, %s201, 63
      %p206 = scmp.lt.s32.totalorder %s21, 0
      %s207 = scalar_select %p206, %s21, 0
      %s208 = sadd.s32 %s207, %s205
      %s209 = smul.addr %s203, 64
      %s210 = sadd.s32 %s208, %s209
      %s211 = smul.addr %s210, 8
      %s212 = scalar_lea.vmem %s0, %s211
      %p213 = pneg %p58
      %p214 = pneg %p55
      %s215 = smul.u32 16, %s21
      %p216 = scmp.lt.s32.totalorder %s19, 0
      %s217 = scalar_select %p216, %s19, 0
      %p218 = scmp.lt.s32.totalorder %s215, 15
      %s219 = scalar_select %p218, %s215, 15
      %s220 = smul.addr %s217, 16
      %s221 = sadd.s32 %s219, %s220
      %s222 = smul.addr %s221, 8
      %s223 = scalar_lea.vmem %s1, %s222
      %p224 = pneg %p86
      %p225 = pneg %p83
      %p226 = scmp.lt.s32.totalorder %s19, 0
      %s227 = scalar_select %p226, %s19, 0
      %s228 = scalar_lea.vmem %s2, %s227
      %p229 = pneg %p112
      %p230 = pneg %p109
      %p231 = pneg %p140
      %p232 = pneg %p137
      %s233 = smul.u32 32, %s20
      %p234 = scmp.lt.s32.totalorder %s19, 0
      %s235 = scalar_select %p234, %s19, 0
      %p236 = scmp.lt.s32.totalorder %s233, 63
      %s237 = scalar_select %p236, %s233, 63
      %s238 = smul.addr %s235, 64
      %s239 = sadd.s32 %s237, %s238
      %s240 = smul.addr %s239, 8
      %s241 = scalar_lea.vmem %s3, %s240
      %s242 = smul.u32 32, %s20
      %p243 = scmp.lt.s32.totalorder %s19, 0
      %s244 = scalar_select %p243, %s19, 0
      %p245 = scmp.lt.s32.totalorder %s242, 63
      %s246 = scalar_select %p245, %s242, 63
      %p247 = scmp.lt.s32.totalorder %s21, 0
      %s248 = scalar_select %p247, %s21, 0
      %s249 = sadd.s32 %s248, %s246
      %s250 = smul.addr %s244, 64
      %s251 = sadd.s32 %s249, %s250
      %s252 = smul.addr %s251, 8
      %s253 = scalar_lea.vmem %s0, %s252
      %s254 = smul.u32 32, %s20
      %s255 = smul.u32 16, %s21
      %p256 = scmp.lt.s32.totalorder %s19, 0
      %s257 = scalar_select %p256, %s19, 0
      %p258 = scmp.lt.s32.totalorder %s255, 15
      %s259 = scalar_select %p258, %s255, 15
      %s260 = smul.addr %s257, 16
      %s261 = sadd.s32 %s259, %s260
      %s262 = smul.addr %s261, 8
      %s263 = scalar_lea.vmem %s1, %s262
      %s264 = smul.u32 16, %s21
      %p265 = scmp.lt.s32.totalorder %s19, 0
      %s266 = scalar_select %p265, %s19, 0
      %s267 = scalar_lea.vmem %s2, %s266
      %s268 = smul.u32 32, %s20
      %p269 = scmp.lt.s32.totalorder %s19, 0
      %s270 = scalar_select %p269, %s19, 0
      %p271 = scmp.lt.s32.totalorder %s268, 63
      %s272 = scalar_select %p271, %s268, 63
      %s273 = smul.addr %s270, 64
      %s274 = sadd.s32 %s272, %s273
      %s275 = smul.addr %s274, 8
      %s276 = scalar_lea.vmem %s3, %s275
      %s277 = smul.u32 32, %s20
      %p278 = scmp.eq.s32.totalorder %s21, 0
      // Predicated region
      $region33: #{masked_conv2d.1} parent=31 // pred_check
        %p279 = pneg %p278
      $region34: #{masked_conv2d.1} parent=31 // pred_check_branch
        %281 = sbr.rel (%p279) target = $region36
      $region35: #{masked_conv2d.1} parent=31 // pred_region
        %282 = vst [vmem:[#allocation2] sm:$0xff] 0.0
        %283 = vst [vmem:[#allocation2 + $0x8] sm:$0xff] 0.0
        %284 = vst [vmem:[#allocation2 + $0x10] sm:$0xff] 0.0
        %285 = vst [vmem:[#allocation2 + $0x18] sm:$0xff] 0.0
        %286 = vst [vmem:[#allocation2 + $0x20] sm:$0xff] 0.0
        %287 = vst [vmem:[#allocation2 + $0x28] sm:$0xff] 0.0
        %288 = vst [vmem:[#allocation2 + $0x30] sm:$0xff] 0.0
        %289 = vst [vmem:[#allocation2 + $0x38] sm:$0xff] 0.0
        %290 = vst [vmem:[#allocation2 + $0x40] sm:$0xff] 0.0
        %291 = vst [vmem:[#allocation2 + $0x48] sm:$0xff] 0.0
        %292 = vst [vmem:[#allocation2 + $0x50] sm:$0xff] 0.0
        %293 = vst [vmem:[#allocation2 + $0x58] sm:$0xff] 0.0
        %294 = vst [vmem:[#allocation2 + $0x60] sm:$0xff] 0.0
        %295 = vst [vmem:[#allocation2 + $0x68] sm:$0xff] 0.0
        %296 = vst [vmem:[#allocation2 + $0x70] sm:$0xff] 0.0
        %297 = vst [vmem:[#allocation2 + $0x78] sm:$0xff] 0.0
        %298 = vst [vmem:[#allocation2 + $0x80] sm:$0xff] 0.0
        %299 = vst [vmem:[#allocation2 + $0x88] sm:$0xff] 0.0
        %300 = vst [vmem:[#allocation2 + $0x90] sm:$0xff] 0.0
        %301 = vst [vmem:[#allocation2 + $0x98] sm:$0xff] 0.0
        %302 = vst [vmem:[#allocation2 + $0xa0] sm:$0xff] 0.0
        %303 = vst [vmem:[#allocation2 + $0xa8] sm:$0xff] 0.0
        %304 = vst [vmem:[#allocation2 + $0xb0] sm:$0xff] 0.0
        %305 = vst [vmem:[#allocation2 + $0xb8] sm:$0xff] 0.0
        %306 = vst [vmem:[#allocation2 + $0xc0] sm:$0xff] 0.0
        %307 = vst [vmem:[#allocation2 + $0xc8] sm:$0xff] 0.0
        %308 = vst [vmem:[#allocation2 + $0xd0] sm:$0xff] 0.0
        %309 = vst [vmem:[#allocation2 + $0xd8] sm:$0xff] 0.0
        %310 = vst [vmem:[#allocation2 + $0xe0] sm:$0xff] 0.0
        %311 = vst [vmem:[#allocation2 + $0xe8] sm:$0xff] 0.0
        %312 = vst [vmem:[#allocation2 + $0xf0] sm:$0xff] 0.0
        %313 = vst [vmem:[#allocation2 + $0xf8] sm:$0xff] 0.0
      $region36: #{masked_conv2d.1} parent=31 // pred_fallthru
        _
      %v314 = vld [vmem:[#allocation2] sm:$0xff]
      %v315 = vld [vmem:[#allocation2 + $0x8] sm:$0xff]
      %v316 = vld [vmem:[#allocation2 + $0x10] sm:$0xff]
      %v317 = vld [vmem:[#allocation2 + $0x18] sm:$0xff]
      %v318 = vld [vmem:[#allocation2 + $0x20] sm:$0xff]
      %v319 = vld [vmem:[#allocation2 + $0x28] sm:$0xff]
      %v320 = vld [vmem:[#allocation2 + $0x30] sm:$0xff]
      %v321 = vld [vmem:[#allocation2 + $0x38] sm:$0xff]
      %v322 = vld [vmem:[#allocation2 + $0x40] sm:$0xff]
      %v323 = vld [vmem:[#allocation2 + $0x48] sm:$0xff]
      %v324 = vld [vmem:[#allocation2 + $0x50] sm:$0xff]
      %v325 = vld [vmem:[#allocation2 + $0x58] sm:$0xff]
      %v326 = vld [vmem:[#allocation2 + $0x60] sm:$0xff]
      %v327 = vld [vmem:[#allocation2 + $0x68] sm:$0xff]
      %v328 = vld [vmem:[#allocation2 + $0x70] sm:$0xff]
      %v329 = vld [vmem:[#allocation2 + $0x78] sm:$0xff]
      %v330 = vld [vmem:[#allocation2 + $0x80] sm:$0xff]
      %v331 = vld [vmem:[#allocation2 + $0x88] sm:$0xff]
      %v332 = vld [vmem:[#allocation2 + $0x90] sm:$0xff]
      %v333 = vld [vmem:[#allocation2 + $0x98] sm:$0xff]
      %v334 = vld [vmem:[#allocation2 + $0xa0] sm:$0xff]
      %v335 = vld [vmem:[#allocation2 + $0xa8] sm:$0xff]
      %v336 = vld [vmem:[#allocation2 + $0xb0] sm:$0xff]
      %v337 = vld [vmem:[#allocation2 + $0xb8] sm:$0xff]
      %v338 = vld [vmem:[#allocation2 + $0xc0] sm:$0xff]
      %v339 = vld [vmem:[#allocation2 + $0xc8] sm:$0xff]
      %v340 = vld [vmem:[#allocation2 + $0xd0] sm:$0xff]
      %v341 = vld [vmem:[#allocation2 + $0xd8] sm:$0xff]
      %v342 = vld [vmem:[#allocation2 + $0xe0] sm:$0xff]
      %v343 = vld [vmem:[#allocation2 + $0xe8] sm:$0xff]
      %v344 = vld [vmem:[#allocation2 + $0xf0] sm:$0xff]
      %v345 = vld [vmem:[#allocation2 + $0xf8] sm:$0xff]
      %v346 = vld [vmem:[%s253] sm:$0xff]
      %v347 = vld [vmem:[%s253 + $0x8] sm:$0xff]
      %v348 = vld [vmem:[%s253 + $0x10] sm:$0xff]
      %v349 = vld [vmem:[%s253 + $0x18] sm:$0xff]
      %v350 = vld [vmem:[%s253 + $0x20] sm:$0xff]
      %v351 = vld [vmem:[%s253 + $0x28] sm:$0xff]
      %v352 = vld [vmem:[%s253 + $0x30] sm:$0xff]
      %v353 = vld [vmem:[%s253 + $0x38] sm:$0xff]
      %v354 = vld [vmem:[%s253 + $0x40] sm:$0xff]
      %v355 = vld [vmem:[%s253 + $0x48] sm:$0xff]
      %v356 = vld [vmem:[%s253 + $0x50] sm:$0xff]
      %v357 = vld [vmem:[%s253 + $0x58] sm:$0xff]
      %v358 = vld [vmem:[%s253 + $0x60] sm:$0xff]
      %v359 = vld [vmem:[%s253 + $0x68] sm:$0xff]
      %v360 = vld [vmem:[%s253 + $0x70] sm:$0xff]
      %v361 = vld [vmem:[%s253 + $0x78] sm:$0xff]
      %v362 = vld [vmem:[%s253 + $0x80] sm:$0xff]
      %v363 = vld [vmem:[%s253 + $0x88] sm:$0xff]
      %v364 = vld [vmem:[%s253 + $0x90] sm:$0xff]
      %v365 = vld [vmem:[%s253 + $0x98] sm:$0xff]
      %v366 = vld [vmem:[%s253 + $0xa0] sm:$0xff]
      %v367 = vld [vmem:[%s253 + $0xa8] sm:$0xff]
      %v368 = vld [vmem:[%s253 + $0xb0] sm:$0xff]
      %v369 = vld [vmem:[%s253 + $0xb8] sm:$0xff]
      %v370 = vld [vmem:[%s253 + $0xc0] sm:$0xff]
      %v371 = vld [vmem:[%s253 + $0xc8] sm:$0xff]
      %v372 = vld [vmem:[%s253 + $0xd0] sm:$0xff]
      %v373 = vld [vmem:[%s253 + $0xd8] sm:$0xff]
      %v374 = vld [vmem:[%s253 + $0xe0] sm:$0xff]
      %v375 = vld [vmem:[%s253 + $0xe8] sm:$0xff]
      %v376 = vld [vmem:[%s253 + $0xf0] sm:$0xff]
      %v377 = vld [vmem:[%s253 + $0xf8] sm:$0xff]
      %v378 = vld [vmem:[%s263] sm:$0xff]
      %v379 = vld [vmem:[%s263 + $0x8] sm:$0xff]
      %v380 = vld [vmem:[%s263 + $0x10] sm:$0xff]
      %v381 = vld [vmem:[%s263 + $0x18] sm:$0xff]
      %v382 = vld [vmem:[%s263 + $0x20] sm:$0xff]
      %v383 = vld [vmem:[%s263 + $0x28] sm:$0xff]
      %v384 = vld [vmem:[%s263 + $0x30] sm:$0xff]
      %v385 = vld [vmem:[%s263 + $0x38] sm:$0xff]
      %v386 = vld [vmem:[%s263 + $0x40] sm:$0xff]
      %v387 = vld [vmem:[%s263 + $0x48] sm:$0xff]
      %v388 = vld [vmem:[%s263 + $0x50] sm:$0xff]
      %v389 = vld [vmem:[%s263 + $0x58] sm:$0xff]
      %v390 = vld [vmem:[%s263 + $0x60] sm:$0xff]
      %v391 = vld [vmem:[%s263 + $0x68] sm:$0xff]
      %v392 = vld [vmem:[%s263 + $0x70] sm:$0xff]
      %v393 = vld [vmem:[%s263 + $0x78] sm:$0xff]
      %394 = vmatprep.subr.mxu0 0.0
      %395 = vmatpush1.msra.mxu0 %v378
      %396 = vmatprep.subr.mxu0 0.0
      %397 = vmatpush1.msra.mxu0 %v379
      %398 = vmatprep.subr.mxu0 0.0
      %399 = vmatpush1.msra.mxu0 %v380
      %400 = vmatprep.subr.mxu0 0.0
      %401 = vmatpush1.msra.mxu0 %v381
      %402 = vmatprep.subr.mxu0 0.0
      %403 = vmatpush1.msra.mxu0 %v382
      %404 = vmatprep.subr.mxu0 0.0
      %405 = vmatpush1.msra.mxu0 %v383
      %406 = vmatprep.subr.mxu0 0.0
      %407 = vmatpush1.msra.mxu0 %v384
      %408 = vmatprep.subr.mxu0 0.0
      %409 = vmatpush1.msra.mxu0 %v385
      %410 = vmatprep.subr.mxu0 0.0
      %411 = vmatpush1.msra.mxu0 %v386
      %412 = vmatprep.subr.mxu0 0.0
      %413 = vmatpush1.msra.mxu0 %v387
      %414 = vmatprep.subr.mxu0 0.0
      %415 = vmatpush1.msra.mxu0 %v388
      %416 = vmatprep.subr.mxu0 0.0
      %417 = vmatpush1.msra.mxu0 %v389
      %418 = vmatprep.subr.mxu0 0.0
      %419 = vmatpush1.msra.mxu0 %v390
      %420 = vmatprep.subr.mxu0 0.0
      %421 = vmatpush1.msra.mxu0 %v391
      %422 = vmatprep.subr.mxu0 0.0
      %423 = vmatpush1.msra.mxu0 %v392
      %424 = vmatprep.subr.mxu0 0.0
      %425 = vmatpush1.msra.mxu0 %v393
      %426 = vmatprep.subr.mxu0 0.0
      %427 = vmatpush1.msra.mxu0 0.0
      %428 = vmatprep.subr.mxu0 0.0
      %429 = vmatpush1.msra.mxu0 0.0
      %430 = vmatprep.subr.mxu0 0.0
      %431 = vmatpush1.msra.mxu0 0.0
      %432 = vmatprep.subr.mxu0 0.0
      %433 = vmatpush1.msra.mxu0 0.0
      %434 = vmatprep.subr.mxu0 0.0
      %435 = vmatpush1.msra.mxu0 0.0
      %436 = vmatprep.subr.mxu0 0.0
      %437 = vmatpush1.msra.mxu0 0.0
      %438 = vmatprep.subr.mxu0 0.0
      %439 = vmatpush1.msra.mxu0 0.0
      %440 = vmatprep.subr.mxu0 0.0
      %441 = vmatpush1.msra.mxu0 0.0
      %442 = vmatprep.subr.mxu0 0.0
      %443 = vmatpush1.msra.mxu0 0.0
      %444 = vmatprep.subr.mxu0 0.0
      %445 = vmatpush1.msra.mxu0 0.0
      %446 = vmatprep.subr.mxu0 0.0
      %447 = vmatpush1.msra.mxu0 0.0
      %448 = vmatprep.subr.mxu0 0.0
      %449 = vmatpush1.msra.mxu0 0.0
      %450 = vmatprep.subr.mxu0 0.0
      %451 = vmatpush1.msra.mxu0 0.0
      %452 = vmatprep.subr.mxu0 0.0
      %453 = vmatpush1.msra.mxu0 0.0
      %454 = vmatprep.subr.mxu0 0.0
      %455 = vmatpush1.msra.mxu0 0.0
      %456 = vmatprep.subr.mxu0 0.0
      %457 = vmatpush1.msra.mxu0 0.0
      %458 = vmatprep.mubr.f32.mxu0 0.0
      %459 = vmatmul.mubr.f32.gmra.mrb[0].mxu0 %v346
      %v460 = vpop.f32.mrb[0].mxu0
      %v461 = vadd.f32 0.0, %v460
      %v462 = vpop.f32.mrb[0].mxu0
      %463 = vmatprep.mubr.f32.mxu0 0.0
      %464 = vmatmul.mubr.f32.gmra.mrb[0].mxu0 %v347
      %v465 = vpop.f32.mrb[0].mxu0
      %v466 = vadd.f32 0.0, %v465
      %v467 = vpop.f32.mrb[0].mxu0
      %468 = vmatprep.mubr.f32.mxu0 0.0
      %469 = vmatmul.mubr.f32.gmra.mrb[0].mxu0 %v348
      %v470 = vpop.f32.mrb[0].mxu0
      %v471 = vadd.f32 0.0, %v470
      %v472 = vpop.f32.mrb[0].mxu0
      %473 = vmatprep.mubr.f32.mxu0 0.0
      %474 = vmatmul.mubr.f32.gmra.mrb[0].mxu0 %v349
      %v475 = vpop.f32.mrb[0].mxu0
      %v476 = vadd.f32 0.0, %v475
      %v477 = vpop.f32.mrb[0].mxu0
      %478 = vmatprep.mubr.f32.mxu0 0.0
      %479 = vmatmul.mubr.f32.gmra.mrb[0].mxu0 %v350
      %v480 = vpop.f32.mrb[0].mxu0
      %v481 = vadd.f32 0.0, %v480
      %v482 = vpop.f32.mrb[0].mxu0
      %483 = vmatprep.mubr.f32.mxu0 0.0
      %484 = vmatmul.mubr.f32.gmra.mrb[0].mxu0 %v351
      %v485 = vpop.f32.mrb[0].mxu0
      %v486 = vadd.f32 0.0, %v485
      %v487 = vpop.f32.mrb[0].mxu0
      %488 = vmatprep.mubr.f32.mxu0 0.0
      %489 = vmatmul.mubr.f32.gmra.mrb[0].mxu0 %v352
      %v490 = vpop.f32.mrb[0].mxu0
      %v491 = vadd.f32 0.0, %v490
      %v492 = vpop.f32.mrb[0].mxu0
      %493 = vmatprep.mubr.f32.mxu0 0.0
      %494 = vmatmul.mubr.f32.gmra.mrb[0].mxu0 %v353
      %v495 = vpop.f32.mrb[0].mxu0
      %v496 = vadd.f32 0.0, %v495
      %v497 = vpop.f32.mrb[0].mxu0
      %498 = vmatprep.mubr.f32.mxu0 0.0
      %499 = vmatmul.mubr.f32.gmra.mrb[0].mxu0 %v354
      %v500 = vpop.f32.mrb[0].mxu0
      %v501 = vadd.f32 0.0, %v500
      %v502 = vpop.f32.mrb[0].mxu0
      %503 = vmatprep.mubr.f32.mxu0 0.0
      %504 = vmatmul.mubr.f32.gmra.mrb[0].mxu0 %v355
      %v505 = vpop.f32.mrb[0].mxu0
      %v506 = vadd.f32 0.0, %v505
      %v507 = vpop.f32.mrb[0].mxu0
      %508 = vmatprep.mubr.f32.mxu0 0.0
      %509 = vmatmul.mubr.f32.gmra.mrb[0].mxu0 %v356
      %v510 = vpop.f32.mrb[0].mxu0
      %v511 = vadd.f32 0.0, %v510
      %v512 = vpop.f32.mrb[0].mxu0
      %513 = vmatprep.mubr.f32.mxu0 0.0
      %514 = vmatmul.mubr.f32.gmra.mrb[0].mxu0 %v357
      %v515 = vpop.f32.mrb[0].mxu0
      %v516 = vadd.f32 0.0, %v515
      %v517 = vpop.f32.mrb[0].mxu0
      %518 = vmatprep.mubr.f32.mxu0 0.0
      %519 = vmatmul.mubr.f32.gmra.mrb[0].mxu0 %v358
      %v520 = vpop.f32.mrb[0].mxu0
      %v521 = vadd.f32 0.0, %v520
      %v522 = vpop.f32.mrb[0].mxu0
      %523 = vmatprep.mubr.f32.mxu0 0.0
      %524 = vmatmul.mubr.f32.gmra.mrb[0].mxu0 %v359
      %v525 = vpop.f32.mrb[0].mxu0
      %v526 = vadd.f32 0.0, %v525
      %v527 = vpop.f32.mrb[0].mxu0
      %528 = vmatprep.mubr.f32.mxu0 0.0
      %529 = vmatmul.mubr.f32.gmra.mrb[0].mxu0 %v360
      %v530 = vpop.f32.mrb[0].mxu0
      %v531 = vadd.f32 0.0, %v530
      %v532 = vpop.f32.mrb[0].mxu0
      %533 = vmatprep.mubr.f32.mxu0 0.0
      %534 = vmatmul.mubr.f32.gmra.mrb[0].mxu0 %v361
      %v535 = vpop.f32.mrb[0].mxu0
      %v536 = vadd.f32 0.0, %v535
      %v537 = vpop.f32.mrb[0].mxu0
      %538 = vmatprep.mubr.f32.mxu0 0.0
      %539 = vmatmul.mubr.f32.gmra.mrb[0].mxu0 %v362
      %v540 = vpop.f32.mrb[0].mxu0
      %v541 = vadd.f32 0.0, %v540
      %v542 = vpop.f32.mrb[0].mxu0
      %543 = vmatprep.mubr.f32.mxu0 0.0
      %544 = vmatmul.mubr.f32.gmra.mrb[0].mxu0 %v363
      %v545 = vpop.f32.mrb[0].mxu0
      %v546 = vadd.f32 0.0, %v545
      %v547 = vpop.f32.mrb[0].mxu0
      %548 = vmatprep.mubr.f32.mxu0 0.0
      %549 = vmatmul.mubr.f32.gmra.mrb[0].mxu0 %v364
      %v550 = vpop.f32.mrb[0].mxu0
      %v551 = vadd.f32 0.0, %v550
      %v552 = vpop.f32.mrb[0].mxu0
      %553 = vmatprep.mubr.f32.mxu0 0.0
      %554 = vmatmul.mubr.f32.gmra.mrb[0].mxu0 %v365
      %v555 = vpop.f32.mrb[0].mxu0
      %v556 = vadd.f32 0.0, %v555
      %v557 = vpop.f32.mrb[0].mxu0
      %558 = vmatprep.mubr.f32.mxu0 0.0
      %559 = vmatmul.mubr.f32.gmra.mrb[0].mxu0 %v366
      %v560 = vpop.f32.mrb[0].mxu0
      %v561 = vadd.f32 0.0, %v560
      %v562 = vpop.f32.mrb[0].mxu0
      %563 = vmatprep.mubr.f32.mxu0 0.0
      %564 = vmatmul.mubr.f32.gmra.mrb[0].mxu0 %v367
      %v565 = vpop.f32.mrb[0].mxu0
      %v566 = vadd.f32 0.0, %v565
      %v567 = vpop.f32.mrb[0].mxu0
      %568 = vmatprep.mubr.f32.mxu0 0.0
      %569 = vmatmul.mubr.f32.gmra.mrb[0].mxu0 %v368
      %v570 = vpop.f32.mrb[0].mxu0
      %v571 = vadd.f32 0.0, %v570
      %v572 = vpop.f32.mrb[0].mxu0
      %573 = vmatprep.mubr.f32.mxu0 0.0
      %574 = vmatmul.mubr.f32.gmra.mrb[0].mxu0 %v369
      %v575 = vpop.f32.mrb[0].mxu0
      %v576 = vadd.f32 0.0, %v575
      %v577 = vpop.f32.mrb[0].mxu0
      %578 = vmatprep.mubr.f32.mxu0 0.0
      %579 = vmatmul.mubr.f32.gmra.mrb[0].mxu0 %v370
      %v580 = vpop.f32.mrb[0].mxu0
      %v581 = vadd.f32 0.0, %v580
      %v582 = vpop.f32.mrb[0].mxu0
      %583 = vmatprep.mubr.f32.mxu0 0.0
      %584 = vmatmul.mubr.f32.gmra.mrb[0].mxu0 %v371
      %v585 = vpop.f32.mrb[0].mxu0
      %v586 = vadd.f32 0.0, %v585
      %v587 = vpop.f32.mrb[0].mxu0
      %588 = vmatprep.mubr.f32.mxu0 0.0
      %589 = vmatmul.mubr.f32.gmra.mrb[0].mxu0 %v372
      %v590 = vpop.f32.mrb[0].mxu0
      %v591 = vadd.f32 0.0, %v590
      %v592 = vpop.f32.mrb[0].mxu0
      %593 = vmatprep.mubr.f32.mxu0 0.0
      %594 = vmatmul.mubr.f32.gmra.mrb[0].mxu0 %v373
      %v595 = vpop.f32.mrb[0].mxu0
      %v596 = vadd.f32 0.0, %v595
      %v597 = vpop.f32.mrb[0].mxu0
      %598 = vmatprep.mubr.f32.mxu0 0.0
      %599 = vmatmul.mubr.f32.gmra.mrb[0].mxu0 %v374
      %v600 = vpop.f32.mrb[0].mxu0
      %v601 = vadd.f32 0.0, %v600
      %v602 = vpop.f32.mrb[0].mxu0
      %603 = vmatprep.mubr.f32.mxu0 0.0
      %604 = vmatmul.mubr.f32.gmra.mrb[0].mxu0 %v375
      %v605 = vpop.f32.mrb[0].mxu0
      %v606 = vadd.f32 0.0, %v605
      %v607 = vpop.f32.mrb[0].mxu0
      %608 = vmatprep.mubr.f32.mxu0 0.0
      %609 = vmatmul.mubr.f32.gmra.mrb[0].mxu0 %v376
      %v610 = vpop.f32.mrb[0].mxu0
      %v611 = vadd.f32 0.0, %v610
      %v612 = vpop.f32.mrb[0].mxu0
      %613 = vmatprep.mubr.f32.mxu0 0.0
      %614 = vmatmul.mubr.f32.gmra.mrb[0].mxu0 %v377
      %v615 = vpop.f32.mrb[0].mxu0
      %v616 = vadd.f32 0.0, %v615
      %v617 = vpop.f32.mrb[0].mxu0
      %618 = vdwg.mxu0
      %v619 = vadd.f32 %v314, %v461
      %v620 = vadd.f32 %v315, %v466
      %v621 = vadd.f32 %v316, %v471
      %v622 = vadd.f32 %v317, %v476
      %v623 = vadd.f32 %v318, %v481
      %v624 = vadd.f32 %v319, %v486
      %v625 = vadd.f32 %v320, %v491
      %v626 = vadd.f32 %v321, %v496
      %v627 = vadd.f32 %v322, %v501
      %v628 = vadd.f32 %v323, %v506
      %v629 = vadd.f32 %v324, %v511
      %v630 = vadd.f32 %v325, %v516
      %v631 = vadd.f32 %v326, %v521
      %v632 = vadd.f32 %v327, %v526
      %v633 = vadd.f32 %v328, %v531
      %v634 = vadd.f32 %v329, %v536
      %v635 = vadd.f32 %v330, %v541
      %v636 = vadd.f32 %v331, %v546
      %v637 = vadd.f32 %v332, %v551
      %v638 = vadd.f32 %v333, %v556
      %v639 = vadd.f32 %v334, %v561
      %v640 = vadd.f32 %v335, %v566
      %v641 = vadd.f32 %v336, %v571
      %v642 = vadd.f32 %v337, %v576
      %v643 = vadd.f32 %v338, %v581
      %v644 = vadd.f32 %v339, %v586
      %v645 = vadd.f32 %v340, %v591
      %v646 = vadd.f32 %v341, %v596
      %v647 = vadd.f32 %v342, %v601
      %v648 = vadd.f32 %v343, %v606
      %v649 = vadd.f32 %v344, %v611
      %v650 = vadd.f32 %v345, %v616
      %651 = vst [vmem:[#allocation2] sm:$0xff] %v619
      %652 = vst [vmem:[#allocation2 + $0x8] sm:$0xff] %v620
      %653 = vst [vmem:[#allocation2 + $0x10] sm:$0xff] %v621
      %654 = vst [vmem:[#allocation2 + $0x18] sm:$0xff] %v622
      %655 = vst [vmem:[#allocation2 + $0x20] sm:$0xff] %v623
      %656 = vst [vmem:[#allocation2 + $0x28] sm:$0xff] %v624
      %657 = vst [vmem:[#allocation2 + $0x30] sm:$0xff] %v625
      %658 = vst [vmem:[#allocation2 + $0x38] sm:$0xff] %v626
      %659 = vst [vmem:[#allocation2 + $0x40] sm:$0xff] %v627
      %660 = vst [vmem:[#allocation2 + $0x48] sm:$0xff] %v628
      %661 = vst [vmem:[#allocation2 + $0x50] sm:$0xff] %v629
      %662 = vst [vmem:[#allocation2 + $0x58] sm:$0xff] %v630
      %663 = vst [vmem:[#allocation2 + $0x60] sm:$0xff] %v631
      %664 = vst [vmem:[#allocation2 + $0x68] sm:$0xff] %v632
      %665 = vst [vmem:[#allocation2 + $0x70] sm:$0xff] %v633
      %666 = vst [vmem:[#allocation2 + $0x78] sm:$0xff] %v634
      %667 = vst [vmem:[#allocation2 + $0x80] sm:$0xff] %v635
      %668 = vst [vmem:[#allocation2 + $0x88] sm:$0xff] %v636
      %669 = vst [vmem:[#allocation2 + $0x90] sm:$0xff] %v637
      %670 = vst [vmem:[#allocation2 + $0x98] sm:$0xff] %v638
      %671 = vst [vmem:[#allocation2 + $0xa0] sm:$0xff] %v639
      %672 = vst [vmem:[#allocation2 + $0xa8] sm:$0xff] %v640
      %673 = vst [vmem:[#allocation2 + $0xb0] sm:$0xff] %v641
      %674 = vst [vmem:[#allocation2 + $0xb8] sm:$0xff] %v642
      %675 = vst [vmem:[#allocation2 + $0xc0] sm:$0xff] %v643
      %676 = vst [vmem:[#allocation2 + $0xc8] sm:$0xff] %v644
      %677 = vst [vmem:[#allocation2 + $0xd0] sm:$0xff] %v645
      %678 = vst [vmem:[#allocation2 + $0xd8] sm:$0xff] %v646
      %679 = vst [vmem:[#allocation2 + $0xe0] sm:$0xff] %v647
      %680 = vst [vmem:[#allocation2 + $0xe8] sm:$0xff] %v648
      %681 = vst [vmem:[#allocation2 + $0xf0] sm:$0xff] %v649
      %682 = vst [vmem:[#allocation2 + $0xf8] sm:$0xff] %v650
      // Predicated region
      $region37: #{masked_conv2d.1} parent=31 // pred_check
        %p683 = pneg %p278
      $region38: #{masked_conv2d.1} parent=31 // pred_check_branch
        %685 = sbr.rel (%p683) target = $region40
      $region39: #{masked_conv2d.1} parent=31 // pred_region
        %v686 = vld [vmem:[#allocation2] sm:$0xff]
        %v687 = vld [vmem:[#allocation2 + $0x8] sm:$0xff]
        %v688 = vld [vmem:[#allocation2 + $0x10] sm:$0xff]
        %v689 = vld [vmem:[#allocation2 + $0x18] sm:$0xff]
        %v690 = vld [vmem:[#allocation2 + $0x20] sm:$0xff]
        %v691 = vld [vmem:[#allocation2 + $0x28] sm:$0xff]
        %v692 = vld [vmem:[#allocation2 + $0x30] sm:$0xff]
        %v693 = vld [vmem:[#allocation2 + $0x38] sm:$0xff]
        %v694 = vld [vmem:[#allocation2 + $0x40] sm:$0xff]
        %v695 = vld [vmem:[#allocation2 + $0x48] sm:$0xff]
        %v696 = vld [vmem:[#allocation2 + $0x50] sm:$0xff]
        %v697 = vld [vmem:[#allocation2 + $0x58] sm:$0xff]
        %v698 = vld [vmem:[#allocation2 + $0x60] sm:$0xff]
        %v699 = vld [vmem:[#allocation2 + $0x68] sm:$0xff]
        %v700 = vld [vmem:[#allocation2 + $0x70] sm:$0xff]
        %v701 = vld [vmem:[#allocation2 + $0x78] sm:$0xff]
        %v702 = vld [vmem:[#allocation2 + $0x80] sm:$0xff]
        %v703 = vld [vmem:[#allocation2 + $0x88] sm:$0xff]
        %v704 = vld [vmem:[#allocation2 + $0x90] sm:$0xff]
        %v705 = vld [vmem:[#allocation2 + $0x98] sm:$0xff]
        %v706 = vld [vmem:[#allocation2 + $0xa0] sm:$0xff]
        %v707 = vld [vmem:[#allocation2 + $0xa8] sm:$0xff]
        %v708 = vld [vmem:[#allocation2 + $0xb0] sm:$0xff]
        %v709 = vld [vmem:[#allocation2 + $0xb8] sm:$0xff]
        %v710 = vld [vmem:[#allocation2 + $0xc0] sm:$0xff]
        %v711 = vld [vmem:[#allocation2 + $0xc8] sm:$0xff]
        %v712 = vld [vmem:[#allocation2 + $0xd0] sm:$0xff]
        %v713 = vld [vmem:[#allocation2 + $0xd8] sm:$0xff]
        %v714 = vld [vmem:[#allocation2 + $0xe0] sm:$0xff]
        %v715 = vld [vmem:[#allocation2 + $0xe8] sm:$0xff]
        %v716 = vld [vmem:[#allocation2 + $0xf0] sm:$0xff]
        %v717 = vld [vmem:[#allocation2 + $0xf8] sm:$0xff]
        %v718 = vld [vmem:[%s267] sm:$0x1]
        %v720 = vlaneseq
        %v721 = vshrl.u32 %v720, 7
        %v722 = vsub.s32 0, %v721
        %v723 = vrot.slane %v718, %v722
        %v725 = vadd.f32 %v686, %v723
        %v726 = vadd.f32 %v687, %v723
        %v727 = vadd.f32 %v688, %v723
        %v728 = vadd.f32 %v689, %v723
        %v729 = vadd.f32 %v690, %v723
        %v730 = vadd.f32 %v691, %v723
        %v731 = vadd.f32 %v692, %v723
        %v732 = vadd.f32 %v693, %v723
        %v733 = vadd.f32 %v694, %v723
        %v734 = vadd.f32 %v695, %v723
        %v735 = vadd.f32 %v696, %v723
        %v736 = vadd.f32 %v697, %v723
        %v737 = vadd.f32 %v698, %v723
        %v738 = vadd.f32 %v699, %v723
        %v739 = vadd.f32 %v700, %v723
        %v740 = vadd.f32 %v701, %v723
        %v741 = vadd.f32 %v702, %v723
        %v742 = vadd.f32 %v703, %v723
        %v743 = vadd.f32 %v704, %v723
        %v744 = vadd.f32 %v705, %v723
        %v745 = vadd.f32 %v706, %v723
        %v746 = vadd.f32 %v707, %v723
        %v747 = vadd.f32 %v708, %v723
        %v748 = vadd.f32 %v709, %v723
        %v749 = vadd.f32 %v710, %v723
        %v750 = vadd.f32 %v711, %v723
        %v751 = vadd.f32 %v712, %v723
        %v752 = vadd.f32 %v713, %v723
        %v753 = vadd.f32 %v714, %v723
        %v754 = vadd.f32 %v715, %v723
        %v755 = vadd.f32 %v716, %v723
        %v756 = vadd.f32 %v717, %v723
        %757 = vst [vmem:[%s276] sm:$0xff] %v725
        %758 = vst [vmem:[%s276 + $0x8] sm:$0xff] %v726
        %759 = vst [vmem:[%s276 + $0x10] sm:$0xff] %v727
        %760 = vst [vmem:[%s276 + $0x18] sm:$0xff] %v728
        %761 = vst [vmem:[%s276 + $0x20] sm:$0xff] %v729
        %762 = vst [vmem:[%s276 + $0x28] sm:$0xff] %v730
        %763 = vst [vmem:[%s276 + $0x30] sm:$0xff] %v731
        %764 = vst [vmem:[%s276 + $0x38] sm:$0xff] %v732
        %765 = vst [vmem:[%s276 + $0x40] sm:$0xff] %v733
        %766 = vst [vmem:[%s276 + $0x48] sm:$0xff] %v734
        %767 = vst [vmem:[%s276 + $0x50] sm:$0xff] %v735
        %768 = vst [vmem:[%s276 + $0x58] sm:$0xff] %v736
        %769 = vst [vmem:[%s276 + $0x60] sm:$0xff] %v737
        %770 = vst [vmem:[%s276 + $0x68] sm:$0xff] %v738
        %771 = vst [vmem:[%s276 + $0x70] sm:$0xff] %v739
        %772 = vst [vmem:[%s276 + $0x78] sm:$0xff] %v740
        %773 = vst [vmem:[%s276 + $0x80] sm:$0xff] %v741
        %774 = vst [vmem:[%s276 + $0x88] sm:$0xff] %v742
        %775 = vst [vmem:[%s276 + $0x90] sm:$0xff] %v743
        %776 = vst [vmem:[%s276 + $0x98] sm:$0xff] %v744
        %777 = vst [vmem:[%s276 + $0xa0] sm:$0xff] %v745
        %778 = vst [vmem:[%s276 + $0xa8] sm:$0xff] %v746
        %779 = vst [vmem:[%s276 + $0xb0] sm:$0xff] %v747
        %780 = vst [vmem:[%s276 + $0xb8] sm:$0xff] %v748
        %781 = vst [vmem:[%s276 + $0xc0] sm:$0xff] %v749
        %782 = vst [vmem:[%s276 + $0xc8] sm:$0xff] %v750
        %783 = vst [vmem:[%s276 + $0xd0] sm:$0xff] %v751
        %784 = vst [vmem:[%s276 + $0xd8] sm:$0xff] %v752
        %785 = vst [vmem:[%s276 + $0xe0] sm:$0xff] %v753
        %786 = vst [vmem:[%s276 + $0xe8] sm:$0xff] %v754
        %787 = vst [vmem:[%s276 + $0xf0] sm:$0xff] %v755
        %788 = vst [vmem:[%s276 + $0xf8] sm:$0xff] %v756
      $region40: #{masked_conv2d.1} parent=31 // pred_fallthru
        _
      %s789 = smul.u32 32, %s20
      %p790 = scmp.lt.s32.totalorder %s19, 0
      %s791 = scalar_select %p790, %s19, 0
      %p792 = scmp.lt.s32.totalorder %s789, 63
      %s793 = scalar_select %p792, %s789, 63
      %s794 = smul.addr %s791, 64
      %s795 = sadd.s32 %s793, %s794
      %s796 = smul.addr %s795, 8
      %s797 = scalar_lea.vmem %s3, %s796
      // Predicated region
      $region41: #{masked_conv2d.1} parent=31 // pred_check
        %p798 = pneg %p137
      $region42: #{masked_conv2d.1} parent=31 // pred_check_branch
        %800 = sbr.rel (%p798) target = $region44
      $region43: #{masked_conv2d.1} parent=31 // pred_region
        %s801 = smul.u32 32, %s20
      $region44: #{masked_conv2d.1} parent=31 // pred_fallthru
        _
    $region32: #{masked_conv2d.1} parent=5 // pred_fallthru
      _
    %p802 = scmp.le.s32.totalorder 2, %s9
    // Predicated region
    $region45: #{masked_conv2d.1} parent=5 // pred_check
      %p803 = pneg %p802
    $region46: #{masked_conv2d.1} parent=5 // pred_check_branch
      %805 = sbr.rel (%p803) target = $region48
    $region47: #{masked_conv2d.1} parent=5 // pred_region
      %s806 = ssub.s32 %s9, 2
      // Predicated region
      $region49: #{masked_conv2d.1} parent=47 // pred_check
        %p807 = pneg %p143
      $region50: #{masked_conv2d.1} parent=47 // pred_check_branch
        %809 = sbr.rel (%p807) target = $region52
      $region51: #{masked_conv2d.1} parent=47 // pred_region
        %s810 = smul.u32 32, %s23
        %p811 = scmp.lt.s32.totalorder %s22, 0
        %s812 = scalar_select %p811, %s22, 0
        %p813 = scmp.lt.s32.totalorder %s810, 63
        %s814 = scalar_select %p813, %s810, 63
        %s815 = smul.addr %s812, 64
        %s816 = sadd.s32 %s814, %s815
        %s817 = smul.addr %s816, 8
        %s818 = scalar_lea.vmem %s3, %s817
      $region52: #{masked_conv2d.1} parent=47 // pred_fallthru
        _
    $region48: #{masked_conv2d.1} parent=5 // pred_fallthru
      _
  $region6: #{masked_conv2d.1} parent=0 // loop_footer
    %s13 = sadd.s32 1, %s9
  $region7: #{masked_conv2d.1} parent=0 // loop_footer_branch
    %8 = sbr.rel target = $region3
  $region8: #{masked_conv2d.1} parent=0 // loop_exit
    _

</llo_original>
